<compile_context>
chip_gen: v5e
topology: v5e:2x2
jax: 0.10.0
libtpu: 0.0.40
codegen_flags: <defaults>
</compile_context>

<pallas_src>
import math

import jax
import jax.numpy as jnp
from jax.experimental import pallas as pl
from jax.experimental.pallas import tpu as pltpu


# ----------------------------- kernels --------------------------------------

def _s1_kernel(x_ref, wfc_ref, bfc_ref, w1_ref, s1_ref):
    # fc:  h = x @ Wfc + bfc ; row-local half of gc1: s1 = h @ W1
    h = jnp.dot(x_ref[...], wfc_ref[...],
                preferred_element_type=jnp.float32) + bfc_ref[...]
    s1 = jnp.dot(h.astype(w1_ref.dtype), w1_ref[...],
                 preferred_element_type=jnp.float32)
    s1_ref[...] = s1.astype(s1_ref.dtype)


def _h1_s2_kernel(adj_ref, s1_ref, b1_ref, w2_ref, s2_ref):
    # gc1 aggregate + bias + ReLU: h1 = relu(adj @ s1 + b1)
    h1 = jnp.dot(adj_ref[...], s1_ref[...],
                 preferred_element_type=jnp.float32) + b1_ref[...]
    h1 = jnp.maximum(h1, 0.0)
    # dropout: module is evaluated in inference mode (training=False) -> identity
    # TODO(synk): training-mode dropout (pltpu.prng_random_bits mask) not wired in.
    # row-local half of gc2: s2 = h1 @ W2
    s2 = jnp.dot(h1.astype(w2_ref.dtype), w2_ref[...],
                 preferred_element_type=jnp.float32)
    s2_ref[...] = s2.astype(s2_ref.dtype)


def _out_kernel(adj_ref, s2_ref, b2_ref, out_ref):
    # gc2 aggregate + bias: out = adj @ s2 + b2
    out_ref[...] = jnp.dot(adj_ref[...], s2_ref[...],
                           preferred_element_type=jnp.float32) + b2_ref[...]


# ----------------------------- helpers ---------------------------------------

def _round_up(x, m):
    return ((x + m - 1) // m) * m


def _pad_to(a, shape, dtype):
    pads = [(0, s - d) for s, d in zip(shape, a.shape)]
    return jnp.pad(a, pads).astype(dtype)


def _block_bytes(shape, dtype):
    n = 1
    for d in shape:
        n *= int(d)
    return n * jnp.dtype(dtype).itemsize


def _vmem_limit(blocks):
    # every block may be double-buffered by the auto pipeline; add headroom
    need = 2 * sum(_block_bytes(s, d) for s, d in blocks) + (2 << 20)
    return int(min(max(need, 16 << 20), 64 << 20))


def _pick_row_tile(n_cols, itemsize, budget_bytes=8 << 20, cap=512):
    # the streamed adj block is (tm, n_cols) and is double-buffered
    tm = budget_bytes // (2 * n_cols * itemsize)
    tm = max(8, (tm // 8) * 8)
    return int(min(tm, cap))


# ----------------------------- forward ---------------------------------------

def gcn_forward(x, adj, params, *, compute_dtype=jnp.bfloat16, row_tile=None):
    """x: [N, in_dim] f32, adj: [N, N] f32 -> [N, nout] f32."""
    wfc, bfc, w1, b1, w2, b2 = params
    bfc = bfc.reshape(1, -1)
    b1 = b1.reshape(1, -1)
    b2 = b2.reshape(1, -1)

    n, in_dim = x.shape
    nfeat, nhid, nout = wfc.shape[1], w1.shape[1], w2.shape[1]

    in_p = _round_up(in_dim, 128)
    f_p = _round_up(nfeat, 128)
    h_p = _round_up(nhid, 128)
    o_p = _round_up(nout, 128)

    itemsize = jnp.dtype(compute_dtype).itemsize
    if row_tile is None:
        row_tile = _pick_row_tile(_round_up(n, 8), itemsize)
    row_tile = max(8, (int(row_tile) // 8) * 8)
    row_tile = min(row_tile, _round_up(n, 8))
    n_p = _round_up(n, row_tile)
    grid = (n_p // row_tile,)

    # zero-padded / casted operands (padding contributes exactly zero)
    xp = _pad_to(x, (n_p, in_p), compute_dtype)
    adjp = _pad_to(adj, (n_p, n_p), compute_dtype)
    wfcp = _pad_to(wfc, (in_p, f_p), compute_dtype)
    w1p = _pad_to(w1, (f_p, h_p), compute_dtype)
    w2p = _pad_to(w2, (h_p, o_p), compute_dtype)
    bfcp = _pad_to(bfc, (1, f_p), jnp.float32)
    b1p = _pad_to(b1, (1, h_p), jnp.float32)
    b2p = _pad_to(b2, (1, o_p), jnp.float32)

    rows = lambda i: (i, 0)
    full = lambda i: (0, 0)
    par = ("parallel",)

    # ---- stage 1: s1 = (x @ Wfc + bfc) @ W1 (row-tiled, row-local) ----------
    s1_blocks = [((row_tile, in_p), compute_dtype),
                 ((in_p, f_p), compute_dtype),
                 ((1, f_p), jnp.float32),
                 ((f_p, h_p), compute_dtype),
                 ((row_tile, h_p), compute_dtype)]
    s1 = pl.pallas_call(
        _s1_kernel,
        out_shape=jax.ShapeDtypeStruct((n_p, h_p), compute_dtype),
        grid=grid,
        in_specs=[pl.BlockSpec((row_tile, in_p), rows),
                  pl.BlockSpec((in_p, f_p), full),
                  pl.BlockSpec((1, f_p), full),
                  pl.BlockSpec((f_p, h_p), full)],
        out_specs=pl.BlockSpec((row_tile, h_p), rows),
        compiler_params=pltpu.CompilerParams(
            dimension_semantics=par, vmem_limit_bytes=_vmem_limit(s1_blocks)),
        cost_estimate=pl.CostEstimate(
            flops=2 * n_p * in_p * f_p + 2 * n_p * f_p * h_p,
            transcendentals=0,
            bytes_accessed=(n_p * in_p + in_p * f_p + f_p * h_p
                            + n_p * h_p) * itemsize),
    )(xp, wfcp, bfcp, w1p)

    # ---- stage 2: s2 = relu(adj @ s1 + b1) @ W2 (adj streamed row-tiled) ----
    s2_blocks = [((row_tile, n_p), compute_dtype),
                 ((n_p, h_p), compute_dtype),
                 ((1, h_p), jnp.float32),
                 ((h_p, o_p), compute_dtype),
                 ((row_tile, o_p), compute_dtype)]
    s2 = pl.pallas_call(
        _h1_s2_kernel,
        out_shape=jax.ShapeDtypeStruct((n_p, o_p), compute_dtype),
        grid=grid,
        in_specs=[pl.BlockSpec((row_tile, n_p), rows),
                  pl.BlockSpec((n_p, h_p), full),
                  pl.BlockSpec((1, h_p), full),
                  pl.BlockSpec((h_p, o_p), full)],
        out_specs=pl.BlockSpec((row_tile, o_p), rows),
        compiler_params=pltpu.CompilerParams(
            dimension_semantics=par, vmem_limit_bytes=_vmem_limit(s2_blocks)),
        cost_estimate=pl.CostEstimate(
            flops=2 * n_p * n_p * h_p + 2 * n_p * h_p * o_p,
            transcendentals=0,
            bytes_accessed=(n_p * n_p + n_p * h_p + h_p * o_p
                            + n_p * o_p) * itemsize),
    )(adjp, s1, b1p, w2p)

    # ---- stage 3: out = adj @ s2 + b2 (adj streamed row-tiled) --------------
    o_blocks = [((row_tile, n_p), compute_dtype),
                ((n_p, o_p), compute_dtype),
                ((1, o_p), jnp.float32),
                ((row_tile, o_p), jnp.float32)]
    out = pl.pallas_call(
        _out_kernel,
        out_shape=jax.ShapeDtypeStruct((n_p, o_p), jnp.float32),
        grid=grid,
        in_specs=[pl.BlockSpec((row_tile, n_p), rows),
                  pl.BlockSpec((n_p, o_p), full),
                  pl.BlockSpec((1, o_p), full)],
        out_specs=pl.BlockSpec((row_tile, o_p), rows),
        compiler_params=pltpu.CompilerParams(
            dimension_semantics=par, vmem_limit_bytes=_vmem_limit(o_blocks)),
        cost_estimate=pl.CostEstimate(
            flops=2 * n_p * n_p * o_p,
            transcendentals=0,
            bytes_accessed=(n_p * n_p + 2 * n_p * o_p) * itemsize),
    )(adjp, s2, b2p)

    return out[:n, :nout]


# ----------------------------- params / reference ----------------------------

def init_params(key, nfeat, nhid, nout, in_dim=66):
    """Deterministic init mirroring the PyTorch module's parameter shapes.

    fc:  Linear(66, nfeat)            -> Wfc [66, nfeat],  bfc [1, nfeat]
    gc1: GraphConvolution(nfeat,nhid) -> W1  [nfeat, nhid], b1 [1, nhid]
    gc2: GraphConvolution(nhid, nout) -> W2  [nhid, nout],  b2 [1, nout]
    """
    ks = jax.random.split(key, 6)

    def uniform(k, shape, bound):
        return jax.random.uniform(k, shape, jnp.float32, -bound, bound)

    b_fc = 1.0 / math.sqrt(in_dim)
    wfc = uniform(ks[0], (in_dim, nfeat), b_fc)
    bfc = uniform(ks[1], (1, nfeat), b_fc)

    b_g1 = 1.0 / math.sqrt(nhid)          # Kipf GCN: stdv = 1/sqrt(out_features)
    w1 = uniform(ks[2], (nfeat, nhid), b_g1)
    b1 = uniform(ks[3], (1, nhid), b_g1)

    b_g2 = 1.0 / math.sqrt(nout)
    w2 = uniform(ks[4], (nhid, nout), b_g2)
    b2 = uniform(ks[5], (1, nout), b_g2)

    return (wfc, bfc, w1, b1, w2, b2)


def reference_forward(x, adj, params):
    wfc, bfc, w1, b1, w2, b2 = params
    h = x @ wfc + bfc
    h1 = jnp.maximum(adj @ (h @ w1) + b1, 0.0)
    return adj @ (h1 @ w2) + b2


if __name__ == "__main__":
    N, IN_DIM = 200, 66
    NFEAT, NHID, NOUT = 32, 32, 16

    key = jax.random.PRNGKey(0)
    k_x, k_a, k_p = jax.random.split(key, 3)

    x = jax.random.normal(k_x, (N, IN_DIM), jnp.float32)

    # row-normalized adjacency with self-loops: D^-1 (A + I)
    a = (jax.random.uniform(k_a, (N, N)) > 0.7).astype(jnp.float32)
    a = jnp.maximum(a, a.T) + jnp.eye(N, dtype=jnp.float32)
    adj = a / jnp.sum(a, axis=1, keepdims=True)

    params = init_params(k_p, NFEAT, NHID, NOUT, IN_DIM)
    ref = reference_forward(x, adj, params)

    # f32 path: tight numerical check; row_tile=64 -> 4-step pipelined grid
    out_f32 = jax.block_until_ready(
        gcn_forward(x, adj, params, compute_dtype=jnp.float32, row_tile=64))
    assert out_f32.shape == (N, NOUT)
    assert jnp.allclose(out_f32, ref, atol=1e-3, rtol=1e-3), \
        float(jnp.max(jnp.abs(out_f32 - ref)))

    # bf16 path: MXU-native on v6e/v7x, f32 accumulate; looser tolerance
    out_bf16 = jax.block_until_ready(
        gcn_forward(x, adj, params, compute_dtype=jnp.bfloat16, row_tile=64))
    assert out_bf16.shape == (N, NOUT)
    assert jnp.allclose(out_bf16, ref, atol=5e-2, rtol=5e-2), \
        float(jnp.max(jnp.abs(out_bf16 - ref)))

    print("KERNEL_OK")
</pallas_src>

<mosaic_0001>
module attributes {stable_mosaic.version = 11 : i64} {
  func.func @_s1_kernel(%arg0: i32, %arg1: memref<64x128xf32, #tpu.memory_space<vmem>>, %arg2: memref<128x128xf32, #tpu.memory_space<vmem>>, %arg3: memref<1x128xf32, #tpu.memory_space<vmem>>, %arg4: memref<128x128xf32, #tpu.memory_space<vmem>>, %arg5: memref<64x128xf32, #tpu.memory_space<vmem>>) attributes {dimension_semantics = [#tpu.dimension_semantics<parallel>], iteration_bounds = array<i64: 4>, scalar_prefetch = 0 : i64, scratch_operands = 0 : i64, tpu.core_type = #tpu.core_type<tc>, window_params = [{transform_indices = @transform_0, window_bounds = array<i64: 64, 128>}, {pipeline_mode = #tpu.pipeline_mode<synchronous>, transform_indices = @transform_1, window_bounds = array<i64: 128, 128>}, {pipeline_mode = #tpu.pipeline_mode<synchronous>, transform_indices = @transform_2, window_bounds = array<i64: 1, 128>}, {pipeline_mode = #tpu.pipeline_mode<synchronous>, transform_indices = @transform_3, window_bounds = array<i64: 128, 128>}, {transform_indices = @transform_4, window_bounds = array<i64: 64, 128>}]} {
    %c0 = arith.constant 0 : index
    %c0_0 = arith.constant 0 : index
    %0 = vector.load %arg1[%c0, %c0_0] : memref<64x128xf32, #tpu.memory_space<vmem>>, vector<64x128xf32>
    %c0_1 = arith.constant 0 : index
    %c0_2 = arith.constant 0 : index
    %1 = vector.load %arg2[%c0_1, %c0_2] : memref<128x128xf32, #tpu.memory_space<vmem>>, vector<128x128xf32>
    %cst = arith.constant dense<0.000000e+00> : vector<64x128xf32>
    %2 = tpu.matmul %0, %1, %cst {dimension_numbers = #tpu.dot_dimension_numbers<[1], [0], [0], [1], [0, 0, 1, 1], [], []>} : vector<64x128xf32>, vector<128x128xf32>, vector<64x128xf32> -> vector<64x128xf32>
    %c0_3 = arith.constant 0 : index
    %c0_4 = arith.constant 0 : index
    %3 = vector.load %arg3[%c0_3, %c0_4] : memref<1x128xf32, #tpu.memory_space<vmem>>, vector<1x128xf32>
    %4 = vector.broadcast %3 : vector<1x128xf32> to vector<64x128xf32>
    %5 = arith.addf %2, %4 : vector<64x128xf32>
    %c0_5 = arith.constant 0 : index
    %c0_6 = arith.constant 0 : index
    %6 = vector.load %arg4[%c0_5, %c0_6] : memref<128x128xf32, #tpu.memory_space<vmem>>, vector<128x128xf32>
    %cst_7 = arith.constant dense<0.000000e+00> : vector<64x128xf32>
    %7 = tpu.matmul %5, %6, %cst_7 {dimension_numbers = #tpu.dot_dimension_numbers<[1], [0], [0], [1], [0, 0, 1, 1], [], []>} : vector<64x128xf32>, vector<128x128xf32>, vector<64x128xf32> -> vector<64x128xf32>
    %c0_8 = arith.constant 0 : index
    %c0_9 = arith.constant 0 : index
    %8 = vector.load %arg5[%c0_8, %c0_9] : memref<64x128xf32, #tpu.memory_space<vmem>>, vector<64x128xf32>
    tpu.vector_store %arg5[%c0_8, %c0_9], %7 {strides = array<i32>} : memref<64x128xf32, #tpu.memory_space<vmem>>, vector<64x128xf32>,
    return
  }
  func.func @transform_0(%arg0: i32) -> (i32, i32) {
    %c0_i32 = arith.constant 0 : i32
    %c0_i32_0 = arith.constant 0 : i32
    return %arg0, %c0_i32 : i32, i32
  }
  func.func @transform_1(%arg0: i32) -> (i32, i32) {
    %c0_i32 = arith.constant 0 : i32
    %c0_i32_0 = arith.constant 0 : i32
    %c0_i32_1 = arith.constant 0 : i32
    return %c0_i32, %c0_i32_0 : i32, i32
  }
  func.func @transform_2(%arg0: i32) -> (i32, i32) {
    %c0_i32 = arith.constant 0 : i32
    %c0_i32_0 = arith.constant 0 : i32
    %c0_i32_1 = arith.constant 0 : i32
    return %c0_i32, %c0_i32_0 : i32, i32
  }
  func.func @transform_3(%arg0: i32) -> (i32, i32) {
    %c0_i32 = arith.constant 0 : i32
    %c0_i32_0 = arith.constant 0 : i32
    %c0_i32_1 = arith.constant 0 : i32
    return %c0_i32, %c0_i32_0 : i32, i32
  }
  func.func @transform_4(%arg0: i32) -> (i32, i32) {
    %c0_i32 = arith.constant 0 : i32
    %c0_i32_0 = arith.constant 0 : i32
    return %arg0, %c0_i32 : i32, i32
  }
}

</mosaic_0001>

<llo_original>
// kernel: tpu_custom_call.1
$region0: #{tpu_custom_call.1}
  #allocation0 [shape = 'u32[]', space=smem, size = 0x4, offset = 0x4, fixed_abs, tag = 'smem constant byte address 0x4 - core index']
  #allocation1 [shape = 'u32[72,128]{1,0:T(1,128)}', space=vmem, size = 0x9000, scoped, tag = 'internal scratch']
  %s0 = inlined_call_operand.hbm [shape: f32[256,128], index: 0, kind: input, shape index: {}]
  %s1 = inlined_call_operand.hbm [shape: f32[128,128], index: 1, kind: input, shape index: {}]
  %s2 = inlined_call_operand.vmem [shape: f32[1,128], index: 2, kind: input, shape index: {}]
  %s3 = inlined_call_operand.hbm [shape: f32[128,128], index: 3, kind: input, shape index: {}]
  %s4 = inlined_call_operand.hbm [shape: f32[256,128], index: 4, kind: output, shape index: {}]
  %s5 = sld [smem:[#allocation0]]
  $region61: #{tpu_custom_call.1} parent=0
    _
  %s7 = ssub.s32 1, %s5
  %s8 = scalar_select 0, %s7, %s5
  $region1: #{tpu_custom_call.1} parent=0
    #allocation2 [shape = 'u8[65536]{0}', space=vmem, size = 0x10000, scoped, tag = 'input window, operand 0']
    #allocation3 [shape = 's32[2]{0}', space=sflag, size = 0x8, scoped, tag = 'scoped memory for tpu_custom_call.1']
    #allocation4 [shape = 's32[2]{0}', space=sflag, size = 0x8, scoped, tag = 'scoped memory for tpu_custom_call.1']
    #allocation5 [shape = 'u8[65536]{0}', space=vmem, size = 0x10000, scoped, tag = 'input window, operand 1, single buffered']
    #allocation6 [shape = 's32[1]{0}', space=sflag, size = 0x4, scoped, tag = 'scoped memory for tpu_custom_call.1']
    #allocation7 [shape = 'u8[65536]{0}', space=vmem, size = 0x10000, scoped, tag = 'input window, operand 3, single buffered']
    #allocation8 [shape = 'u8[65536]{0}', space=vmem, size = 0x10000, scoped, tag = 'output window, operand 0']
    %9 = vsyncpa [#allocation3], 0
    %s10 = scalar_lea.sflag [#allocation3], 1
    %11 = vsyncpa %s10, 0
    %12 = vsyncpa [#allocation6], 0
    %13 = vsyncpa [#allocation4], 0
    %s14 = scalar_lea.sflag [#allocation4], 1
    %15 = vsyncpa %s14, 0
    loop: start=0, step=1, limit=6
    $region2: #{tpu_custom_call.1} parent=1 // loop_pre_header
      _
    $region3: #{tpu_custom_call.1} parent=1 // loop_header
      %s17 = sphi 0, %s21
      %p18 = scmp.ge.s32.totalorder %s17, 6
      %s27 = sphi 0, %s29
      %s30 = sphi 0, %s27
      %s31 = sphi 0, %s30
      %s47 = sphi 0, %s31
      %s51 = sphi 0, %s51
      %s53 = sphi 0, %s51
      %s54 = sphi 0, %s53
      %s68 = sphi 0, %s54
      %s72 = sphi 0, %s72
      %s74 = sphi 0, %s72
      %s75 = sphi 0, %s74
      %s89 = sphi 0, %s75
      %s93 = sphi 0, %s93
      %s95 = sphi 0, %s93
      %s96 = sphi 0, %s95
      %s110 = sphi 0, %s96
      %s116 = sphi 0, %s118
      %s119 = sphi 0, %s116
      %s120 = sphi 0, %s119
      %s136 = sphi 0, %s120
    $region4: #{tpu_custom_call.1} parent=1 // loop_header_branch
      %20 = sbr.rel (%p18) target = $region8
    $region5: #{tpu_custom_call.1} parent=1 // loop_body
      %s22 = ssub.s32 %s17, 1
      %s23 = ssub.s32 %s17, 2
      %s24 = sadd.s32 %s17, 1
      %s25 = ssub.s32 %s17, %s24
      %p26 = scmp.eq.s32.totalorder %s25, 0
      %s28 = sadd.s32 %s27, 1
      %s29 = scalar_select %p26, %s27, %s28
      %p32 = pneg %p26
      %p33 = scmp.eq.s32.totalorder %s17, 3
      %p34 = por %p32, %p33
      %p35 = scmp.ne.s32.totalorder %s27, %s30
      %p36 = scmp.eq.s32.totalorder %s17, 0
      %p37 = por %p35, %p36
      %p38 = scmp.ne.s32.totalorder %s27, %s30
      %p39 = scmp.eq.s32.totalorder %s22, 3
      %p40 = por %p38, %p39
      %p41 = scmp.ne.s32.totalorder %s30, %s31
      %p42 = scmp.eq.s32.totalorder %s22, 0
      %p43 = por %p41, %p42
      %p44 = scmp.ne.s32.totalorder %s30, %s31
      %p45 = scmp.eq.s32.totalorder %s23, 3
      %p46 = por %p44, %p45
      %p48 = scmp.ne.s32.totalorder %s31, %s47
      %p49 = scmp.eq.s32.totalorder %s23, 0
      %p50 = por %p48, %p49
      %s52 = sadd.s32 %s51, 1
      %p55 = scmp.eq.s32.totalorder %s17, 3
      %p56 = scmp.ne.s32.totalorder %s51, %s53
      %p57 = scmp.eq.s32.totalorder %s17, 0
      %p58 = por %p56, %p57
      %p59 = scmp.ne.s32.totalorder %s51, %s53
      %p60 = scmp.eq.s32.totalorder %s22, 3
      %p61 = por %p59, %p60
      %p62 = scmp.ne.s32.totalorder %s53, %s54
      %p63 = scmp.eq.s32.totalorder %s22, 0
      %p64 = por %p62, %p63
      %p65 = scmp.ne.s32.totalorder %s53, %s54
      %p66 = scmp.eq.s32.totalorder %s23, 3
      %p67 = por %p65, %p66
      %p69 = scmp.ne.s32.totalorder %s54, %s68
      %p70 = scmp.eq.s32.totalorder %s23, 0
      %p71 = por %p69, %p70
      %s73 = sadd.s32 %s72, 1
      %p76 = scmp.eq.s32.totalorder %s17, 3
      %p77 = scmp.ne.s32.totalorder %s72, %s74
      %p78 = scmp.eq.s32.totalorder %s17, 0
      %p79 = por %p77, %p78
      %p80 = scmp.ne.s32.totalorder %s72, %s74
      %p81 = scmp.eq.s32.totalorder %s22, 3
      %p82 = por %p80, %p81
      %p83 = scmp.ne.s32.totalorder %s74, %s75
      %p84 = scmp.eq.s32.totalorder %s22, 0
      %p85 = por %p83, %p84
      %p86 = scmp.ne.s32.totalorder %s74, %s75
      %p87 = scmp.eq.s32.totalorder %s23, 3
      %p88 = por %p86, %p87
      %p90 = scmp.ne.s32.totalorder %s75, %s89
      %p91 = scmp.eq.s32.totalorder %s23, 0
      %p92 = por %p90, %p91
      %s94 = sadd.s32 %s93, 1
      %p97 = scmp.eq.s32.totalorder %s17, 3
      %p98 = scmp.ne.s32.totalorder %s93, %s95
      %p99 = scmp.eq.s32.totalorder %s17, 0
      %p100 = por %p98, %p99
      %p101 = scmp.ne.s32.totalorder %s93, %s95
      %p102 = scmp.eq.s32.totalorder %s22, 3
      %p103 = por %p101, %p102
      %p104 = scmp.ne.s32.totalorder %s95, %s96
      %p105 = scmp.eq.s32.totalorder %s22, 0
      %p106 = por %p104, %p105
      %p107 = scmp.ne.s32.totalorder %s95, %s96
      %p108 = scmp.eq.s32.totalorder %s23, 3
      %p109 = por %p107, %p108
      %p111 = scmp.ne.s32.totalorder %s96, %s110
      %p112 = scmp.eq.s32.totalorder %s23, 0
      %p113 = por %p111, %p112
      %s114 = ssub.s32 %s17, %s24
      %p115 = scmp.eq.s32.totalorder %s114, 0
      %s117 = sadd.s32 %s116, 1
      %s118 = scalar_select %p115, %s116, %s117
      %p121 = pneg %p115
      %p122 = scmp.eq.s32.totalorder %s17, 3
      %p123 = por %p121, %p122
      %p124 = scmp.ne.s32.totalorder %s116, %s119
      %p125 = scmp.eq.s32.totalorder %s17, 0
      %p126 = por %p124, %p125
      %p127 = scmp.ne.s32.totalorder %s116, %s119
      %p128 = scmp.eq.s32.totalorder %s22, 3
      %p129 = por %p127, %p128
      %p130 = scmp.ne.s32.totalorder %s119, %s120
      %p131 = scmp.eq.s32.totalorder %s22, 0
      %p132 = por %p130, %p131
      %p133 = scmp.ne.s32.totalorder %s119, %s120
      %p134 = scmp.eq.s32.totalorder %s23, 3
      %p135 = por %p133, %p134
      %p137 = scmp.ne.s32.totalorder %s120, %s136
      %p138 = scmp.eq.s32.totalorder %s23, 0
      %p139 = por %p137, %p138
      %p140 = scmp.le.s32.totalorder 1, %s17
      %p141 = scmp.lt.s32.totalorder %s17, 5
      %p142 = pnand %p140, %p141
      %p143 = pneg %p142
      // Predicated region
      $region9: #{tpu_custom_call.1} parent=5 // pred_check
        _
      $region10: #{tpu_custom_call.1} parent=5 // pred_check_branch
        %145 = sbr.rel (%p142) target = $region12
      $region11: #{tpu_custom_call.1} parent=5 // pred_region
        %s146 = ssub.s32 %s17, 1
        // Predicated region
        $region13: #{tpu_custom_call.1} parent=11 // pred_check
          %p147 = pneg %p64
        $region14: #{tpu_custom_call.1} parent=11 // pred_check_branch
          %149 = sbr.rel (%p147) target = $region16
        $region15: #{tpu_custom_call.1} parent=11 // pred_region
          %151 = vsyncadd [#allocation6], 0
          %s152 = sshll.u32 %s1, 4
          %s153 = int_to_ptr.hbm [resolvable:$true] %s152
          %s154 = sshll.u32 [#allocation5], 4
          %s155 = int_to_ptr.vmem [resolvable:$true] %s154
          %160 = dma.hbm_to_vmem [thread:$0]  %s153, 2048, %s155, [#allocation6], 128, 128, 8
        $region16: #{tpu_custom_call.1} parent=11 // pred_fallthru
          _
        // Predicated region
        $region17: #{tpu_custom_call.1} parent=11 // pred_check
          %p161 = pneg %p85
        $region18: #{tpu_custom_call.1} parent=11 // pred_check_branch
          %163 = sbr.rel (%p161) target = $region20
        $region19: #{tpu_custom_call.1} parent=11 // pred_region
          _
        $region20: #{tpu_custom_call.1} parent=11 // pred_fallthru
          _
        // Predicated region
        $region21: #{tpu_custom_call.1} parent=11 // pred_check
          %p164 = pneg %p106
        $region22: #{tpu_custom_call.1} parent=11 // pred_check_branch
          %166 = sbr.rel (%p164) target = $region24
        $region23: #{tpu_custom_call.1} parent=11 // pred_region
          %168 = vsyncadd [#allocation6], 0
          %s169 = sshll.u32 %s3, 4
          %s170 = int_to_ptr.hbm [resolvable:$true] %s169
          %s171 = sshll.u32 [#allocation7], 4
          %s172 = int_to_ptr.vmem [resolvable:$true] %s171
          %177 = dma.hbm_to_vmem [thread:$0]  %s170, 2048, %s172, [#allocation6], 128, 128, 8
        $region24: #{tpu_custom_call.1} parent=11 // pred_fallthru
          _
      $region12: #{tpu_custom_call.1} parent=5 // pred_fallthru
        _
      %p178 = scmp.lt.s32.totalorder %s17, 4
      // Predicated region
      $region25: #{tpu_custom_call.1} parent=5 // pred_check
        %p179 = pneg %p178
      $region26: #{tpu_custom_call.1} parent=5 // pred_check_branch
        %181 = sbr.rel (%p179) target = $region28
      $region27: #{tpu_custom_call.1} parent=5 // pred_region
        // Predicated region
        $region29: #{tpu_custom_call.1} parent=27 // pred_check
          %p182 = pneg %p37
        $region30: #{tpu_custom_call.1} parent=27 // pred_check_branch
          %184 = sbr.rel (%p182) target = $region32
        $region31: #{tpu_custom_call.1} parent=27 // pred_region
          %s185 = sand.u32 %s27, 1
          %s186 = scalar_lea.sflag [#allocation3], %s185
          %s187 = sand.u32 %s27, 1
          %s188 = smul.addr %s187, 64
          %s189 = scalar_lea.vmem [#allocation2], %s188
          %s190 = smul.u32 8, %s17
          %192 = vsyncadd %s186, 0
          %s193 = smul.addr %s190, 8
          %s194 = scalar_lea.hbm %s0, %s193
          %s195 = sshll.u32 %s194, 4
          %s196 = int_to_ptr.hbm [resolvable:$true] %s195
          %s197 = sshll.u32 %s189, 4
          %s198 = int_to_ptr.vmem [resolvable:$true] %s197
          %203 = dma.hbm_to_vmem [thread:$0]  %s196, 1024, %s198, %s186, 128, 128, 8
        $region32: #{tpu_custom_call.1} parent=27 // pred_fallthru
          _
      $region28: #{tpu_custom_call.1} parent=5 // pred_fallthru
        _
      %p204 = scmp.le.s32.totalorder 1, %s17
      %p205 = scmp.lt.s32.totalorder %s17, 5
      %p206 = pnand %p204, %p205
      %p207 = pneg %p206
      // Predicated region
      $region33: #{tpu_custom_call.1} parent=5 // pred_check
        _
      $region34: #{tpu_custom_call.1} parent=5 // pred_check_branch
        %209 = sbr.rel (%p206) target = $region36
      $region35: #{tpu_custom_call.1} parent=5 // pred_region
        %s210 = ssub.s32 %s17, 1
        %s211 = sand.u32 %s30, 1
        %s212 = scalar_lea.sflag [#allocation3], %s211
        %s213 = sand.u32 %s30, 1
        %s214 = smul.addr %s213, 64
        %s215 = scalar_lea.vmem [#allocation2], %s214
        // Predicated region
        $region37: #{tpu_custom_call.1} parent=35 // pred_check
          %p216 = pneg %p43
        $region38: #{tpu_custom_call.1} parent=35 // pred_check_branch
          %218 = sbr.rel (%p216) target = $region40
        $region39: #{tpu_custom_call.1} parent=35 // pred_region
          %220 = dma.done %s212, 1024
        $region40: #{tpu_custom_call.1} parent=35 // pred_fallthru
          _
        // Predicated region
        $region41: #{tpu_custom_call.1} parent=35 // pred_check
          %p221 = pneg %p64
        $region42: #{tpu_custom_call.1} parent=35 // pred_check_branch
          %223 = sbr.rel (%p221) target = $region44
        $region43: #{tpu_custom_call.1} parent=35 // pred_region
          %225 = dma.done [#allocation6], 2048
        $region44: #{tpu_custom_call.1} parent=35 // pred_fallthru
          _
        // Predicated region
        $region45: #{tpu_custom_call.1} parent=35 // pred_check
          %p226 = pneg %p106
        $region46: #{tpu_custom_call.1} parent=35 // pred_check_branch
          %228 = sbr.rel (%p226) target = $region48
        $region47: #{tpu_custom_call.1} parent=35 // pred_region
          %230 = dma.done [#allocation6], 2048
        $region48: #{tpu_custom_call.1} parent=35 // pred_fallthru
          _
        %s231 = sand.u32 %s30, 1
        %s232 = scalar_lea.sflag [#allocation3], %s231
        %s233 = sand.u32 %s30, 1
        %s234 = smul.addr %s233, 64
        %s235 = scalar_lea.vmem [#allocation2], %s234
        %p236 = pneg %p43
        %p237 = pneg %p40
        %p238 = pneg %p64
        %p239 = pneg %p61
        %p240 = pneg %p85
        %p241 = pneg %p82
        %p242 = pneg %p106
        %p243 = pneg %p103
        %p244 = pneg %p132
        %p245 = pneg %p129
        %s246 = sand.u32 %s119, 1
        %s247 = scalar_lea.sflag [#allocation4], %s246
        %s248 = sand.u32 %s119, 1
        %s249 = smul.addr %s248, 64
        %s250 = scalar_lea.vmem [#allocation8], %s249
        %s251 = smul.u32 8, %s22
        %s252 = smul.u32 8, %s22
        %v253 = vld [vmem:[%s215] sm:$0xff]
        %v254 = vld [vmem:[%s215 + $0x8] sm:$0xff]
        %v255 = vld [vmem:[%s215 + $0x10] sm:$0xff]
        %v256 = vld [vmem:[%s215 + $0x18] sm:$0xff]
        %v257 = vld [vmem:[%s215 + $0x20] sm:$0xff]
        %v258 = vld [vmem:[%s215 + $0x28] sm:$0xff]
        %v259 = vld [vmem:[%s215 + $0x30] sm:$0xff]
        %v260 = vld [vmem:[%s215 + $0x38] sm:$0xff]
        %v261 = vld [vmem:[#allocation5] sm:$0xff]
        %v262 = vld [vmem:[#allocation5 + $0x8] sm:$0xff]
        %v263 = vld [vmem:[#allocation5 + $0x10] sm:$0xff]
        %v264 = vld [vmem:[#allocation5 + $0x18] sm:$0xff]
        %v265 = vld [vmem:[#allocation5 + $0x20] sm:$0xff]
        %v266 = vld [vmem:[#allocation5 + $0x28] sm:$0xff]
        %v267 = vld [vmem:[#allocation5 + $0x30] sm:$0xff]
        %v268 = vld [vmem:[#allocation5 + $0x38] sm:$0xff]
        %v269 = vld [vmem:[#allocation5 + $0x40] sm:$0xff]
        %v270 = vld [vmem:[#allocation5 + $0x48] sm:$0xff]
        %v271 = vld [vmem:[#allocation5 + $0x50] sm:$0xff]
        %v272 = vld [vmem:[#allocation5 + $0x58] sm:$0xff]
        %v273 = vld [vmem:[#allocation5 + $0x60] sm:$0xff]
        %v274 = vld [vmem:[#allocation5 + $0x68] sm:$0xff]
        %v275 = vld [vmem:[#allocation5 + $0x70] sm:$0xff]
        %v276 = vld [vmem:[#allocation5 + $0x78] sm:$0xff]
        %v277 = vld [vmem:[%s2] sm:$0x1]
        %v279 = vperm.slane %v277, 0
        %281 = vmatpush.msra.mxu0 %v276
        %282 = vmatpush.msra.mxu0 %v275
        %283 = vmatpush.msra.mxu0 %v274
        %284 = vmatpush.msra.mxu0 %v273
        %285 = vmatpush.msra.mxu0 %v272
        %286 = vmatpush.msra.mxu0 %v271
        %287 = vmatpush.msra.mxu0 %v270
        %288 = vmatpush.msra.mxu0 %v269
        %289 = vmatpush.msra.mxu0 %v268
        %290 = vmatpush.msra.mxu0 %v267
        %291 = vmatpush.msra.mxu0 %v266
        %292 = vmatpush.msra.mxu0 %v265
        %293 = vmatpush.msra.mxu0 %v264
        %294 = vmatpush.msra.mxu0 %v263
        %295 = vmatpush.msra.mxu0 %v262
        %296 = vmatpush.msra.mxu0 %v261
        %297 = vmatmul.f32.gmra.mxu0 %v253
        %v298 = vpop.f32.mrf.mxu0
        %v299 = vadd.f32 %v279, %v298
        %300 = vmatmul.f32.gmra.mxu0 %v254
        %v301 = vpop.f32.mrf.mxu0
        %v302 = vadd.f32 %v279, %v301
        %303 = vmatmul.f32.gmra.mxu0 %v255
        %v304 = vpop.f32.mrf.mxu0
        %v305 = vadd.f32 %v279, %v304
        %306 = vmatmul.f32.gmra.mxu0 %v256
        %v307 = vpop.f32.mrf.mxu0
        %v308 = vadd.f32 %v279, %v307
        %309 = vmatmul.f32.gmra.mxu0 %v257
        %v310 = vpop.f32.mrf.mxu0
        %v311 = vadd.f32 %v279, %v310
        %312 = vmatmul.f32.gmra.mxu0 %v258
        %v313 = vpop.f32.mrf.mxu0
        %v314 = vadd.f32 %v279, %v313
        %315 = vmatmul.f32.gmra.mxu0 %v259
        %v316 = vpop.f32.mrf.mxu0
        %v317 = vadd.f32 %v279, %v316
        %318 = vmatmul.f32.gmra.mxu0 %v260
        %v319 = vpop.f32.mrf.mxu0
        %v320 = vadd.f32 %v279, %v319
        %321 = vdwg.mxu0
        %v322 = vld [vmem:[#allocation7] sm:$0xff]
        %v323 = vld [vmem:[#allocation7 + $0x8] sm:$0xff]
        %v324 = vld [vmem:[#allocation7 + $0x10] sm:$0xff]
        %v325 = vld [vmem:[#allocation7 + $0x18] sm:$0xff]
        %v326 = vld [vmem:[#allocation7 + $0x20] sm:$0xff]
        %v327 = vld [vmem:[#allocation7 + $0x28] sm:$0xff]
        %v328 = vld [vmem:[#allocation7 + $0x30] sm:$0xff]
        %v329 = vld [vmem:[#allocation7 + $0x38] sm:$0xff]
        %v330 = vld [vmem:[#allocation7 + $0x40] sm:$0xff]
        %v331 = vld [vmem:[#allocation7 + $0x48] sm:$0xff]
        %v332 = vld [vmem:[#allocation7 + $0x50] sm:$0xff]
        %v333 = vld [vmem:[#allocation7 + $0x58] sm:$0xff]
        %v334 = vld [vmem:[#allocation7 + $0x60] sm:$0xff]
        %v335 = vld [vmem:[#allocation7 + $0x68] sm:$0xff]
        %v336 = vld [vmem:[#allocation7 + $0x70] sm:$0xff]
        %v337 = vld [vmem:[#allocation7 + $0x78] sm:$0xff]
        %338 = vmatpush.msra.mxu0 %v337
        %339 = vmatpush.msra.mxu0 %v336
        %340 = vmatpush.msra.mxu0 %v335
        %341 = vmatpush.msra.mxu0 %v334
        %342 = vmatpush.msra.mxu0 %v333
        %343 = vmatpush.msra.mxu0 %v332
        %344 = vmatpush.msra.mxu0 %v331
        %345 = vmatpush.msra.mxu0 %v330
        %346 = vmatpush.msra.mxu0 %v329
        %347 = vmatpush.msra.mxu0 %v328
        %348 = vmatpush.msra.mxu0 %v327
        %349 = vmatpush.msra.mxu0 %v326
        %350 = vmatpush.msra.mxu0 %v325
        %351 = vmatpush.msra.mxu0 %v324
        %352 = vmatpush.msra.mxu0 %v323
        %353 = vmatpush.msra.mxu0 %v322
        %354 = vmatmul.f32.gmra.mxu0 %v299
        %v355 = vpop.f32.mrf.mxu0
        %v356 = vadd.f32 0.0, %v355
        %357 = vmatmul.f32.gmra.mxu0 %v302
        %v358 = vpop.f32.mrf.mxu0
        %v359 = vadd.f32 0.0, %v358
        %360 = vmatmul.f32.gmra.mxu0 %v305
        %v361 = vpop.f32.mrf.mxu0
        %v362 = vadd.f32 0.0, %v361
        %363 = vmatmul.f32.gmra.mxu0 %v308
        %v364 = vpop.f32.mrf.mxu0
        %v365 = vadd.f32 0.0, %v364
        %366 = vmatmul.f32.gmra.mxu0 %v311
        %v367 = vpop.f32.mrf.mxu0
        %v368 = vadd.f32 0.0, %v367
        %369 = vmatmul.f32.gmra.mxu0 %v314
        %v370 = vpop.f32.mrf.mxu0
        %v371 = vadd.f32 0.0, %v370
        %372 = vmatmul.f32.gmra.mxu0 %v317
        %v373 = vpop.f32.mrf.mxu0
        %v374 = vadd.f32 0.0, %v373
        %375 = vmatmul.f32.gmra.mxu0 %v320
        %v376 = vpop.f32.mrf.mxu0
        %v377 = vadd.f32 0.0, %v376
        %378 = vdwg.mxu0
        %379 = vst [vmem:[%s250] sm:$0xff] %v356
        %380 = vst [vmem:[%s250 + $0x8] sm:$0xff] %v359
        %381 = vst [vmem:[%s250 + $0x10] sm:$0xff] %v362
        %382 = vst [vmem:[%s250 + $0x18] sm:$0xff] %v365
        %383 = vst [vmem:[%s250 + $0x20] sm:$0xff] %v368
        %384 = vst [vmem:[%s250 + $0x28] sm:$0xff] %v371
        %385 = vst [vmem:[%s250 + $0x30] sm:$0xff] %v374
        %386 = vst [vmem:[%s250 + $0x38] sm:$0xff] %v377
        %s387 = sand.u32 %s119, 1
        %s388 = scalar_lea.sflag [#allocation4], %s387
        %s389 = sand.u32 %s119, 1
        %s390 = smul.addr %s389, 64
        %s391 = scalar_lea.vmem [#allocation8], %s390
        // Predicated region
        $region49: #{tpu_custom_call.1} parent=35 // pred_check
          %p392 = pneg %p129
        $region50: #{tpu_custom_call.1} parent=35 // pred_check_branch
          %394 = sbr.rel (%p392) target = $region52
        $region51: #{tpu_custom_call.1} parent=35 // pred_region
          %s395 = smul.u32 8, %s22
          %397 = vsyncadd %s388, 0
          %s398 = smul.addr %s395, 8
          %s399 = scalar_lea.hbm %s4, %s398
          %s400 = sshll.u32 %s391, 4
          %s401 = int_to_ptr.vmem [resolvable:$true] %s400
          %s402 = sshll.u32 %s399, 4
          %s403 = int_to_ptr.hbm [resolvable:$true] %s402
          %408 = dma.vmem_to_hbm [thread:$0]  %s401, 1024, %s403, %s388, 128, 128, 8
        $region52: #{tpu_custom_call.1} parent=35 // pred_fallthru
          _
      $region36: #{tpu_custom_call.1} parent=5 // pred_fallthru
        _
      %p409 = scmp.le.s32.totalorder 2, %s17
      // Predicated region
      $region53: #{tpu_custom_call.1} parent=5 // pred_check
        %p410 = pneg %p409
      $region54: #{tpu_custom_call.1} parent=5 // pred_check_branch
        %412 = sbr.rel (%p410) target = $region56
      $region55: #{tpu_custom_call.1} parent=5 // pred_region
        %s413 = ssub.s32 %s17, 2
        // Predicated region
        $region57: #{tpu_custom_call.1} parent=55 // pred_check
          %p414 = pneg %p135
        $region58: #{tpu_custom_call.1} parent=55 // pred_check_branch
          %416 = sbr.rel (%p414) target = $region60
        $region59: #{tpu_custom_call.1} parent=55 // pred_region
          %s417 = sand.u32 %s120, 1
          %s418 = scalar_lea.sflag [#allocation4], %s417
          %s419 = sand.u32 %s120, 1
          %s420 = smul.addr %s419, 64
          %s421 = scalar_lea.vmem [#allocation8], %s420
          %423 = dma.done %s418, 1024
        $region60: #{tpu_custom_call.1} parent=55 // pred_fallthru
          _
      $region56: #{tpu_custom_call.1} parent=5 // pred_fallthru
        _
    $region6: #{tpu_custom_call.1} parent=1 // loop_footer
      %s21 = sadd.s32 1, %s17
    $region7: #{tpu_custom_call.1} parent=1 // loop_footer_branch
      %16 = sbr.rel target = $region3
    $region8: #{tpu_custom_call.1} parent=1 // loop_exit
      _
    %424 = vsyncpa [#allocation3], 1
    %s425 = scalar_lea.sflag [#allocation3], 1
    %426 = vsyncpa %s425, 1
    %427 = vsyncpa [#allocation6], 1
    %428 = vsyncpa [#allocation4], 1
    %s429 = scalar_lea.sflag [#allocation4], 1
    %430 = vsyncpa %s429, 1

</llo_original>
